<compile_context>
chip_gen: v6e
topology: v6e:2x2x1
jax: 0.10.0
libtpu: 0.0.40
codegen_flags: <defaults>
</compile_context>

<pallas_src>
import functools

import jax
import jax.numpy as jnp
from jax.experimental import pallas as pl
from jax.experimental.pallas import tpu as pltpu


def _round_up(x, m):
    return (x + m - 1) // m * m


# ---------------------------------------------------------------------------
# One-time parameter packing (host side, NOT per step)
# ---------------------------------------------------------------------------
def pack_params(params, fast_tau, slow_tau):
    """Packs weights + tau blend vectors into lane-dense, MXU-aligned blocks (built once)."""
    in_dim, fast_dim = params["wi2f"].shape
    slow_dim = params["ws2s"].shape[1]
    out_dim = params["wout"].shape[1]
    fs = fast_dim + slow_dim
    np_ = _round_up(fs, 128)          # packed state width  [fast | slow | 0pad]
    po = _round_up(out_dim, 128)      # packed output width [out | 0pad]
    f32 = jnp.float32

    w_x = jnp.zeros((in_dim, np_), f32).at[:, :fast_dim].set(params["wi2f"])
    w_h = jnp.zeros((np_, np_), f32)
    w_h = w_h.at[:fast_dim, :fast_dim].set(params["wf2f"])
    w_h = w_h.at[:fast_dim, fast_dim:fs].set(params["wf2s"])
    w_h = w_h.at[fast_dim:fs, :fast_dim].set(params["ws2f"])
    w_h = w_h.at[fast_dim:fs, fast_dim:fs].set(params["ws2s"])
    w_o = jnp.zeros((np_, po), f32).at[:fast_dim, :out_dim].set(params["wout"])
    b_o = jnp.zeros((1, po), f32).at[:, :out_dim].set(params["bout"].reshape(1, out_dim))

    inv = jnp.zeros((1, np_), f32)
    inv = inv.at[:, :fast_dim].set(1.0 / fast_tau)
    inv = inv.at[:, fast_dim:fs].set(1.0 / slow_tau)
    keep = jnp.zeros((1, np_), f32)
    keep = keep.at[:, :fast_dim].set(1.0 - 1.0 / fast_tau)
    keep = keep.at[:, fast_dim:fs].set(1.0 - 1.0 / slow_tau)

    return {
        "w_x": w_x, "w_h": w_h, "w_o": w_o, "b_o": b_o,
        "keep": keep, "inv": inv,
        "dims": (in_dim, fast_dim, slow_dim, out_dim),
        "pads": (np_, po),
    }


def _pack_state(state, b, bp, fast_dim, slow_dim, np_):
    """state tuple -> (h_slab, u_slab) of shape (bp, Np), zero-padded (state=None -> zeros)."""
    if state is None:
        z = jnp.zeros((bp, np_), jnp.float32)
        return z, z
    h_fast, h_slow, u_fast, u_slow = state
    fs = fast_dim + slow_dim

    def pack(a_fast, a_slow):
        a = jnp.concatenate([a_fast, a_slow], axis=1)
        return jnp.pad(a, ((0, bp - b), (0, np_ - fs)))

    return pack(h_fast, h_slow), pack(u_fast, u_slow)


def _unpack_state(h_slab, u_slab, b, fast_dim, slow_dim):
    fs = fast_dim + slow_dim
    return (h_slab[:b, :fast_dim], h_slab[:b, fast_dim:fs],
            u_slab[:b, :fast_dim], u_slab[:b, fast_dim:fs])


# ---------------------------------------------------------------------------
# Single-step kernel (matches BasicMTRNN.forward exactly)
# ---------------------------------------------------------------------------
def _mtrnn_step_kernel(mxu_dtype, x_ref, h0_ref, u0_ref, keep_ref, inv_ref,
                       wx_ref, wh_ref, wo_ref, bo_ref, out_ref):
    rec = (jnp.dot(x_ref[...].astype(mxu_dtype), wx_ref[...].astype(mxu_dtype),
                   preferred_element_type=jnp.float32)
           + jnp.dot(h0_ref[...].astype(mxu_dtype), wh_ref[...].astype(mxu_dtype),
                     preferred_element_type=jnp.float32))
    u = keep_ref[...] * u0_ref[...] + inv_ref[...] * rec       # fused fast/slow tau blend
    h = jnp.tanh(u)
    y = jnp.tanh(jnp.dot(h.astype(mxu_dtype), wo_ref[...].astype(mxu_dtype),
                         preferred_element_type=jnp.float32) + bo_ref[...])
    # Single lane-dense slab, every piece already 128-aligned: [y | h | u]
    out_ref[...] = jnp.concatenate([y, h, u], axis=-1)


def basic_mtrnn_forward(packed, x, state=None, mxu_dtype=jnp.float32):
    """One BasicMTRNN step. Returns (y_hat, (h_fast', h_slow', u_fast', u_slow'))."""
    in_dim, fast_dim, slow_dim, out_dim = packed["dims"]
    np_, po = packed["pads"]
    b = x.shape[0]
    bp = _round_up(b, 8)                        # fill all 8 sublanes of the f32 vreg
    x_p = x if b == bp else jnp.pad(x, ((0, bp - b), (0, 0)))
    h0, u0 = _pack_state(state, b, bp, fast_dim, slow_dim, np_)

    vmem = pl.BlockSpec(memory_space=pltpu.MemorySpace.VMEM)
    slab = pl.pallas_call(
        functools.partial(_mtrnn_step_kernel, mxu_dtype),
        out_shape=jax.ShapeDtypeStruct((bp, po + 2 * np_), jnp.float32),
        in_specs=[vmem] * 9,
        out_specs=vmem,
    )(x_p, h0, u0, packed["keep"], packed["inv"],
      packed["w_x"], packed["w_h"], packed["w_o"], packed["b_o"])

    y = slab[:b, :out_dim]
    h_slab = slab[:, po:po + np_]
    u_slab = slab[:, po + np_:]
    return y, _unpack_state(h_slab, u_slab, b, fast_dim, slow_dim)


# ---------------------------------------------------------------------------
# Sequence rollout: time chunks per grid step, weights resident, state in VMEM scratch
# ---------------------------------------------------------------------------
def _mtrnn_rollout_kernel(Tc, last_chunk, last_inner, mxu_dtype,
                          x_ref, h0_ref, u0_ref, keep_ref, inv_ref,
                          wx_ref, wh_ref, wo_ref, bo_ref,
                          y_ref, fin_ref,
                          h_sc, u_sc):
    c = pl.program_id(0)

    @pl.when(c == 0)
    def _():
        h_sc[...] = h0_ref[...]
        u_sc[...] = u0_ref[...]

    bp = h_sc.shape[0]
    keep = keep_ref[...]
    inv = inv_ref[...]
    wh = wh_ref[...].astype(mxu_dtype)
    wo = wo_ref[...].astype(mxu_dtype)
    bo = bo_ref[...]

    # Input projection for the whole chunk hoisted out of the sequential loop:
    # one wide MXU pass; only the recurrent matmul stays on the critical path.
    x_proj = jnp.dot(x_ref[...].astype(mxu_dtype), wx_ref[...].astype(mxu_dtype),
                     preferred_element_type=jnp.float32)        # (Tc*bp, Np)

    h = h_sc[...]
    u = u_sc[...]
    for i in range(Tc):                                         # static, short unrolled loop
        rec = x_proj[i * bp:(i + 1) * bp] + jnp.dot(
            h.astype(mxu_dtype), wh, preferred_element_type=jnp.float32)
        u = keep * u + inv * rec
        h = jnp.tanh(u)
        y_ref[i] = jnp.tanh(jnp.dot(h.astype(mxu_dtype), wo,
                                    preferred_element_type=jnp.float32) + bo)
        if i == last_inner:
            captured_h, captured_u = h, u

            @pl.when(c == last_chunk)                           # emit final state exactly once
            def _():
                fin_ref[...] = jnp.concatenate([captured_h, captured_u], axis=-1)

    h_sc[...] = h
    u_sc[...] = u


def basic_mtrnn_rollout(packed, x_seq, state=None, time_chunk=8, mxu_dtype=jnp.float32):
    """Applies the BasicMTRNN step over a (T, B, in_dim) sequence in ONE kernel.

    Returns (y_seq (T, B, out_dim), final_state tuple)."""
    in_dim, fast_dim, slow_dim, out_dim = packed["dims"]
    np_, po = packed["pads"]
    T, b = x_seq.shape[0], x_seq.shape[1]
    bp = _round_up(b, 8)
    Tc = max(1, min(int(time_chunk), T))
    n_chunks = pl.cdiv(T, Tc)
    Tp = n_chunks * Tc
    last_chunk = (T - 1) // Tc
    last_inner = (T - 1) % Tc

    # Pad time to a chunk multiple and batch to 8 sublanes; flatten (T, B) so each chunk's
    # x DMA is one contiguous (Tc*bp, in_dim) slab (no in-kernel reshape needed).
    x_p = jnp.pad(x_seq, ((0, Tp - T), (0, bp - b), (0, 0)))
    x2d = x_p.reshape(Tp * bp, in_dim)
    h0, u0 = _pack_state(state, b, bp, fast_dim, slow_dim, np_)

    const2 = lambda c: (0, 0)
    kernel = functools.partial(_mtrnn_rollout_kernel, Tc, last_chunk, last_inner, mxu_dtype)

    y3d, fin = pl.pallas_call(
        kernel,
        grid=(n_chunks,),
        out_shape=(
            jax.ShapeDtypeStruct((Tp, bp, po), jnp.float32),
            jax.ShapeDtypeStruct((bp, 2 * np_), jnp.float32),
        ),
        in_specs=[
            pl.BlockSpec((Tc * bp, in_dim), lambda c: (c, 0)),   # x chunk (time-flattened)
            pl.BlockSpec((bp, np_), const2),                     # h0  (copied once)
            pl.BlockSpec((bp, np_), const2),                     # u0  (copied once)
            pl.BlockSpec((1, np_), const2),                      # keep vec (resident)
            pl.BlockSpec((1, np_), const2),                      # inv  vec (resident)
            pl.BlockSpec((in_dim, np_), const2),                 # W_x (resident)
            pl.BlockSpec((np_, np_), const2),                    # W_h (resident)
            pl.BlockSpec((np_, po), const2),                     # W_o (resident)
            pl.BlockSpec((1, po), const2),                       # b_o (resident)
        ],
        out_specs=(
            pl.BlockSpec((Tc, bp, po), lambda c: (c, 0, 0)),     # per-chunk y (lane dense)
            pl.BlockSpec((bp, 2 * np_), const2),                 # final state (written once)
        ),
        scratch_shapes=[
            pltpu.VMEM((bp, np_), jnp.float32),                  # h carry
            pltpu.VMEM((bp, np_), jnp.float32),                  # u carry
        ],
        compiler_params=pltpu.CompilerParams(dimension_semantics=("arbitrary",)),
    )(x2d, h0, u0, packed["keep"], packed["inv"],
      packed["w_x"], packed["w_h"], packed["w_o"], packed["b_o"])

    y_seq = y3d[:T, :b, :out_dim]
    final_state = _unpack_state(fin[:, :np_], fin[:, np_:], b, fast_dim, slow_dim)
    return y_seq, final_state


# ---------------------------------------------------------------------------
# Pure-JAX references
# ---------------------------------------------------------------------------
def _reference_forward(params, x, state, fast_tau, slow_tau):
    h_fast, h_slow, u_fast, u_slow = state
    new_u_fast = (1.0 - 1.0 / fast_tau) * u_fast + (1.0 / fast_tau) * (
        x @ params["wi2f"] + h_fast @ params["wf2f"] + h_slow @ params["ws2f"])
    new_u_slow = (1.0 - 1.0 / slow_tau) * u_slow + (1.0 / slow_tau) * (
        h_fast @ params["wf2s"] + h_slow @ params["ws2s"])
    new_h_fast = jnp.tanh(new_u_fast)
    new_h_slow = jnp.tanh(new_u_slow)
    y = jnp.tanh(new_h_fast @ params["wout"] + params["bout"])
    return y, (new_h_fast, new_h_slow, new_u_fast, new_u_slow)


def _reference_rollout(params, x_seq, state, fast_tau, slow_tau):
    ys = []
    for t in range(x_seq.shape[0]):
        y, state = _reference_forward(params, x_seq[t], state, fast_tau, slow_tau)
        ys.append(y)
    return jnp.stack(ys, axis=0), state


if __name__ == "__main__":
    # Hyperparameters consistent with BasicMTRNN(in_dim, fast_dim, slow_dim, fast_tau, slow_tau)
    batch = 2
    in_dim = 16
    fast_dim = 32
    slow_dim = 16
    out_dim = in_dim          # out_dim defaults to in_dim
    fast_tau = 2.0
    slow_tau = 12.0
    T = 8                     # rollout length for the sequence kernel

    key = jax.random.PRNGKey(0)
    keys = jax.random.split(key, 9)

    # nn.Linear stores (out, in); we store the transpose (in, out) so kernels do x @ W.
    def init(k, shape, fan_in):
        bound = 1.0 / jnp.sqrt(fan_in)
        return jax.random.uniform(k, shape, jnp.float32, -bound, bound)

    params = {
        "wi2f": init(keys[0], (in_dim, fast_dim), in_dim),
        "wf2f": init(keys[1], (fast_dim, fast_dim), fast_dim),
        "ws2f": init(keys[2], (slow_dim, fast_dim), slow_dim),
        "wf2s": init(keys[3], (fast_dim, slow_dim), fast_dim),
        "ws2s": init(keys[4], (slow_dim, slow_dim), slow_dim),
        "wout": init(keys[5], (fast_dim, out_dim), fast_dim),
        "bout": init(keys[6], (1, out_dim), fast_dim),
    }
    packed = pack_params(params, fast_tau, slow_tau)   # fused/padded blocks built ONCE

    x = jax.random.normal(keys[7], (batch, in_dim), jnp.float32)
    x_seq = jax.random.normal(keys[8], (T, batch, in_dim), jnp.float32)

    # state=None in the PyTorch module -> zero-initialized states
    state0 = (
        jnp.zeros((batch, fast_dim), jnp.float32),
        jnp.zeros((batch, slow_dim), jnp.float32),
        jnp.zeros((batch, fast_dim), jnp.float32),
        jnp.zeros((batch, slow_dim), jnp.float32),
    )

    # --- single step (exact BasicMTRNN.forward semantics) ---
    y_hat, rnn_hid = basic_mtrnn_forward(packed, x, state0)
    jax.block_until_ready(y_hat)
    jax.block_until_ready(rnn_hid)

    y_ref, hid_ref = _reference_forward(params, x, state0, fast_tau, slow_tau)
    assert jnp.allclose(y_hat, y_ref, atol=1e-5, rtol=1e-5)
    for a, b_ in zip(rnn_hid, hid_ref):
        assert jnp.allclose(a, b_, atol=1e-5, rtol=1e-5)

    # --- full sequence in one kernel (time chunks of 4 -> 2 grid steps) ---
    y_seq, fin_state = basic_mtrnn_rollout(packed, x_seq, state0, time_chunk=4)
    jax.block_until_ready(y_seq)
    jax.block_until_ready(fin_state)

    y_seq_ref, fin_ref = _reference_rollout(params, x_seq, state0, fast_tau, slow_tau)
    assert jnp.allclose(y_seq, y_seq_ref, atol=1e-4, rtol=1e-4)
    for a, b_ in zip(fin_state, fin_ref):
        assert jnp.allclose(a, b_, atol=1e-4, rtol=1e-4)

    # --- ragged sequence length (T=6 not divisible by chunk=4: padded-time path) ---
    y_seq6, fin6 = basic_mtrnn_rollout(packed, x_seq[:6], state0, time_chunk=4)
    jax.block_until_ready(y_seq6)
    y_ref6, fin_ref6 = _reference_rollout(params, x_seq[:6], state0, fast_tau, slow_tau)
    assert jnp.allclose(y_seq6, y_ref6, atol=1e-4, rtol=1e-4)
    for a, b_ in zip(fin6, fin_ref6):
        assert jnp.allclose(a, b_, atol=1e-4, rtol=1e-4)

    print("KERNEL_OK")
</pallas_src>

<mosaic_0001>
module attributes {stable_mosaic.version = 11 : i64} {
  func.func @_mtrnn_step_kernel(%arg0: memref<8x16xf32, #tpu.memory_space<vmem>>, %arg1: memref<8x128xf32, #tpu.memory_space<vmem>>, %arg2: memref<8x128xf32, #tpu.memory_space<vmem>>, %arg3: memref<1x128xf32, #tpu.memory_space<vmem>>, %arg4: memref<1x128xf32, #tpu.memory_space<vmem>>, %arg5: memref<16x128xf32, #tpu.memory_space<vmem>>, %arg6: memref<128x128xf32, #tpu.memory_space<vmem>>, %arg7: memref<128x128xf32, #tpu.memory_space<vmem>>, %arg8: memref<1x128xf32, #tpu.memory_space<vmem>>, %arg9: memref<8x384xf32, #tpu.memory_space<vmem>>) attributes {dimension_semantics = [], scalar_prefetch = 0 : i64, scratch_operands = 0 : i64, tpu.core_type = #tpu.core_type<tc>} {
    %c0 = arith.constant 0 : index
    %c0_0 = arith.constant 0 : index
    %0 = vector.load %arg0[%c0, %c0_0] : memref<8x16xf32, #tpu.memory_space<vmem>>, vector<8x16xf32>
    %c0_1 = arith.constant 0 : index
    %c0_2 = arith.constant 0 : index
    %1 = vector.load %arg5[%c0_1, %c0_2] : memref<16x128xf32, #tpu.memory_space<vmem>>, vector<16x128xf32>
    %cst = arith.constant dense<0.000000e+00> : vector<8x128xf32>
    %2 = tpu.matmul %0, %1, %cst {dimension_numbers = #tpu.dot_dimension_numbers<[1], [0], [0], [1], [0, 0, 1, 1], [], []>} : vector<8x16xf32>, vector<16x128xf32>, vector<8x128xf32> -> vector<8x128xf32>
    %c0_3 = arith.constant 0 : index
    %c0_4 = arith.constant 0 : index
    %3 = vector.load %arg1[%c0_3, %c0_4] : memref<8x128xf32, #tpu.memory_space<vmem>>, vector<8x128xf32>
    %c0_5 = arith.constant 0 : index
    %c0_6 = arith.constant 0 : index
    %4 = vector.load %arg6[%c0_5, %c0_6] : memref<128x128xf32, #tpu.memory_space<vmem>>, vector<128x128xf32>
    %cst_7 = arith.constant dense<0.000000e+00> : vector<8x128xf32>
    %5 = tpu.matmul %3, %4, %cst_7 {dimension_numbers = #tpu.dot_dimension_numbers<[1], [0], [0], [1], [0, 0, 1, 1], [], []>} : vector<8x128xf32>, vector<128x128xf32>, vector<8x128xf32> -> vector<8x128xf32>
    %6 = arith.addf %2, %5 : vector<8x128xf32>
    %c0_8 = arith.constant 0 : index
    %c0_9 = arith.constant 0 : index
    %7 = vector.load %arg3[%c0_8, %c0_9] : memref<1x128xf32, #tpu.memory_space<vmem>>, vector<1x128xf32>
    %c0_10 = arith.constant 0 : index
    %c0_11 = arith.constant 0 : index
    %8 = vector.load %arg2[%c0_10, %c0_11] : memref<8x128xf32, #tpu.memory_space<vmem>>, vector<8x128xf32>
    %9 = vector.broadcast %7 : vector<1x128xf32> to vector<8x128xf32>
    %10 = arith.mulf %9, %8 : vector<8x128xf32>
    %c0_12 = arith.constant 0 : index
    %c0_13 = arith.constant 0 : index
    %11 = vector.load %arg4[%c0_12, %c0_13] : memref<1x128xf32, #tpu.memory_space<vmem>>, vector<1x128xf32>
    %12 = vector.broadcast %11 : vector<1x128xf32> to vector<8x128xf32>
    %13 = arith.mulf %12, %6 : vector<8x128xf32>
    %14 = arith.addf %10, %13 : vector<8x128xf32>
    %15 = math.tanh %14 : vector<8x128xf32>
    %c0_14 = arith.constant 0 : index
    %c0_15 = arith.constant 0 : index
    %16 = vector.load %arg7[%c0_14, %c0_15] : memref<128x128xf32, #tpu.memory_space<vmem>>, vector<128x128xf32>
    %cst_16 = arith.constant dense<0.000000e+00> : vector<8x128xf32>
    %17 = tpu.matmul %15, %16, %cst_16 {dimension_numbers = #tpu.dot_dimension_numbers<[1], [0], [0], [1], [0, 0, 1, 1], [], []>} : vector<8x128xf32>, vector<128x128xf32>, vector<8x128xf32> -> vector<8x128xf32>
    %c0_17 = arith.constant 0 : index
    %c0_18 = arith.constant 0 : index
    %18 = vector.load %arg8[%c0_17, %c0_18] : memref<1x128xf32, #tpu.memory_space<vmem>>, vector<1x128xf32>
    %19 = vector.broadcast %18 : vector<1x128xf32> to vector<8x128xf32>
    %20 = arith.addf %17, %19 : vector<8x128xf32>
    %21 = math.tanh %20 : vector<8x128xf32>
    %22 = tpu.concatenate %21, %15, %14 in 1 : vector<8x128xf32>, vector<8x128xf32>, vector<8x128xf32> -> vector<8x384xf32>
    %c0_19 = arith.constant 0 : index
    %c0_20 = arith.constant 0 : index
    %23 = vector.load %arg9[%c0_19, %c0_20] : memref<8x384xf32, #tpu.memory_space<vmem>>, vector<8x384xf32>
    tpu.vector_store %arg9[%c0_19, %c0_20], %22 {strides = array<i32>} : memref<8x384xf32, #tpu.memory_space<vmem>>, vector<8x384xf32>,
    return
  }
}

</mosaic_0001>

<llo_original>
// kernel: tpu_custom_call.1
$region0: #{tpu_custom_call.1}
  #allocation0 [shape = 'u32[]', space=smem, size = 0x4, offset = 0x4, fixed_abs, tag = 'smem constant byte address 0x4 - core index']
  #allocation1 [shape = 'u32[144,128]{1,0:T(1,128)}', space=vmem, size = 0x12000, scoped, tag = 'internal scratch']
  %s0 = inlined_call_operand.hbm [shape: f32[8,16], index: 0, kind: input, shape index: {}]
  %s1 = inlined_call_operand.hbm [shape: f32[8,128], index: 1, kind: input, shape index: {}]
  %s2 = inlined_call_operand.hbm [shape: f32[8,128], index: 2, kind: input, shape index: {}]
  %s3 = inlined_call_operand.vmem [shape: f32[1,128], index: 3, kind: input, shape index: {}]
  %s4 = inlined_call_operand.vmem [shape: f32[1,128], index: 4, kind: input, shape index: {}]
  %s5 = inlined_call_operand.hbm [shape: f32[16,128], index: 5, kind: input, shape index: {}]
  %s6 = inlined_call_operand.hbm [shape: f32[128,128], index: 6, kind: input, shape index: {}]
  %s7 = inlined_call_operand.hbm [shape: f32[128,128], index: 7, kind: input, shape index: {}]
  %s8 = inlined_call_operand.vmem [shape: f32[1,128], index: 8, kind: input, shape index: {}]
  %s9 = inlined_call_operand.hbm [shape: f32[8,384], index: 9, kind: output, shape index: {}]
  %s10 = sld [smem:[#allocation0]]
  $region70: #{tpu_custom_call.1} parent=0
    _
  %s12 = ssub.s32 1, %s10
  %s13 = scalar_select 0, %s12, %s10
  $region1: #{tpu_custom_call.1} parent=0
    #allocation2 [shape = 'u8[4096]{0}', space=vmem, size = 0x1000, scoped, tag = 'input window, operand 0, single buffered']
    #allocation3 [shape = 's32[1]{0}', space=sflag, size = 0x4, scoped, tag = 'scoped memory for tpu_custom_call.1']
    #allocation4 [shape = 's32[1]{0}', space=sflag, size = 0x4, scoped, tag = 'scoped memory for tpu_custom_call.1']
    #allocation5 [shape = 'u8[4096]{0}', space=vmem, size = 0x1000, scoped, tag = 'input window, operand 1, single buffered']
    #allocation6 [shape = 's32[1]{0}', space=sflag, size = 0x4, scoped, tag = 'scoped memory for tpu_custom_call.1']
    #allocation7 [shape = 'u8[4096]{0}', space=vmem, size = 0x1000, scoped, tag = 'input window, operand 2, single buffered']
    #allocation8 [shape = 'u8[8192]{0}', space=vmem, size = 0x2000, scoped, tag = 'input window, operand 5, single buffered']
    #allocation9 [shape = 's32[1]{0}', space=sflag, size = 0x4, scoped, tag = 'scoped memory for tpu_custom_call.1']
    #allocation10 [shape = 'u8[65536]{0}', space=vmem, size = 0x10000, scoped, tag = 'input window, operand 6, single buffered']
    #allocation11 [shape = 'u8[65536]{0}', space=vmem, size = 0x10000, scoped, tag = 'input window, operand 7, single buffered']
    #allocation12 [shape = 's32[1]{0}', space=sflag, size = 0x4, scoped, tag = 'scoped memory for tpu_custom_call.1']
    #allocation13 [shape = 'u8[12288]{0}', space=vmem, size = 0x3000, scoped, tag = 'output window, operand 0, single buffered']
    %14 = vsyncpa [#allocation3], 0
    %15 = vsyncpa [#allocation6], 0
    %16 = vsyncpa [#allocation9], 0
    %17 = vsyncpa [#allocation12], 0
    %18 = vsyncpa [#allocation4], 0
    // Predicated region
    $region2: #{tpu_custom_call.1} parent=1 // pred_check
      _
    $region3: #{tpu_custom_call.1} parent=1 // pred_check_branch
      %20 = sbr.rel (0) target = $region5
    $region4: #{tpu_custom_call.1} parent=1 // pred_region
      %s22 = ssub.s32 128, 128
      %23 = vsyncadd [#allocation3], %s22
      %s25 = sshll.u32 [#allocation2], 4
      %s26 = int_to_ptr.vmem [resolvable:$true] %s25
      %28 = dma.hbm_to_vmem [thread:$0]  %s0, 128, %s26, [#allocation3]
    $region5: #{tpu_custom_call.1} parent=1 // pred_fallthru
      _
    // Predicated region
    $region6: #{tpu_custom_call.1} parent=1 // pred_check
      _
    $region7: #{tpu_custom_call.1} parent=1 // pred_check_branch
      %30 = sbr.rel (0) target = $region9
    $region8: #{tpu_custom_call.1} parent=1 // pred_region
      %s32 = ssub.s32 128, 128
      %33 = vsyncadd [#allocation6], %s32
      %s35 = sshll.u32 [#allocation5], 4
      %s36 = int_to_ptr.vmem [resolvable:$true] %s35
      %38 = dma.hbm_to_vmem [thread:$0]  %s1, 128, %s36, [#allocation6]
    $region9: #{tpu_custom_call.1} parent=1 // pred_fallthru
      _
    // Predicated region
    $region10: #{tpu_custom_call.1} parent=1 // pred_check
      _
    $region11: #{tpu_custom_call.1} parent=1 // pred_check_branch
      %40 = sbr.rel (0) target = $region13
    $region12: #{tpu_custom_call.1} parent=1 // pred_region
      %s42 = ssub.s32 128, 128
      %43 = vsyncadd [#allocation6], %s42
      %s45 = sshll.u32 [#allocation7], 4
      %s46 = int_to_ptr.vmem [resolvable:$true] %s45
      %48 = dma.hbm_to_vmem [thread:$0]  %s2, 128, %s46, [#allocation6]
    $region13: #{tpu_custom_call.1} parent=1 // pred_fallthru
      _
    // Predicated region
    $region14: #{tpu_custom_call.1} parent=1 // pred_check
      _
    $region15: #{tpu_custom_call.1} parent=1 // pred_check_branch
      %50 = sbr.rel (0) target = $region17
    $region16: #{tpu_custom_call.1} parent=1 // pred_region
      _
    $region17: #{tpu_custom_call.1} parent=1 // pred_fallthru
      _
    // Predicated region
    $region18: #{tpu_custom_call.1} parent=1 // pred_check
      _
    $region19: #{tpu_custom_call.1} parent=1 // pred_check_branch
      %52 = sbr.rel (0) target = $region21
    $region20: #{tpu_custom_call.1} parent=1 // pred_region
      _
    $region21: #{tpu_custom_call.1} parent=1 // pred_fallthru
      _
    // Predicated region
    $region22: #{tpu_custom_call.1} parent=1 // pred_check
      _
    $region23: #{tpu_custom_call.1} parent=1 // pred_check_branch
      %54 = sbr.rel (0) target = $region25
    $region24: #{tpu_custom_call.1} parent=1 // pred_region
      %s56 = ssub.s32 256, 256
      %57 = vsyncadd [#allocation9], %s56
      %s58 = sshll.u32 [#allocation8], 4
      %s59 = int_to_ptr.vmem [resolvable:$true] %s58
      %64 = dma.hbm_to_vmem [thread:$0]  %s5, 256, %s59, [#allocation9], 128, 128, 8
    $region25: #{tpu_custom_call.1} parent=1 // pred_fallthru
      _
    // Predicated region
    $region26: #{tpu_custom_call.1} parent=1 // pred_check
      _
    $region27: #{tpu_custom_call.1} parent=1 // pred_check_branch
      %66 = sbr.rel (0) target = $region29
    $region28: #{tpu_custom_call.1} parent=1 // pred_region
      %s68 = ssub.s32 2048, 2048
      %69 = vsyncadd [#allocation9], %s68
      %s70 = sshll.u32 [#allocation10], 4
      %s71 = int_to_ptr.vmem [resolvable:$true] %s70
      %76 = dma.hbm_to_vmem [thread:$0]  %s6, 2048, %s71, [#allocation9], 128, 128, 8
    $region29: #{tpu_custom_call.1} parent=1 // pred_fallthru
      _
    // Predicated region
    $region30: #{tpu_custom_call.1} parent=1 // pred_check
      _
    $region31: #{tpu_custom_call.1} parent=1 // pred_check_branch
      %78 = sbr.rel (0) target = $region33
    $region32: #{tpu_custom_call.1} parent=1 // pred_region
      %s80 = ssub.s32 2048, 2048
      %81 = vsyncadd [#allocation12], %s80
      %s82 = sshll.u32 [#allocation11], 4
      %s83 = int_to_ptr.vmem [resolvable:$true] %s82
      %88 = dma.hbm_to_vmem [thread:$0]  %s7, 2048, %s83, [#allocation12], 128, 128, 8
    $region33: #{tpu_custom_call.1} parent=1 // pred_fallthru
      _
    // Predicated region
    $region34: #{tpu_custom_call.1} parent=1 // pred_check
      _
    $region35: #{tpu_custom_call.1} parent=1 // pred_check_branch
      %90 = sbr.rel (0) target = $region37
    $region36: #{tpu_custom_call.1} parent=1 // pred_region
      _
    $region37: #{tpu_custom_call.1} parent=1 // pred_fallthru
      _
    // Predicated region
    $region38: #{tpu_custom_call.1} parent=1 // pred_check
      _
    $region39: #{tpu_custom_call.1} parent=1 // pred_check_branch
      %92 = sbr.rel (0) target = $region41
    $region40: #{tpu_custom_call.1} parent=1 // pred_region
      %93 = dma.done [#allocation3], 128
    $region41: #{tpu_custom_call.1} parent=1 // pred_fallthru
      _
    // Predicated region
    $region42: #{tpu_custom_call.1} parent=1 // pred_check
      _
    $region43: #{tpu_custom_call.1} parent=1 // pred_check_branch
      %95 = sbr.rel (0) target = $region45
    $region44: #{tpu_custom_call.1} parent=1 // pred_region
      %96 = dma.done [#allocation6], 128
    $region45: #{tpu_custom_call.1} parent=1 // pred_fallthru
      _
    // Predicated region
    $region46: #{tpu_custom_call.1} parent=1 // pred_check
      _
    $region47: #{tpu_custom_call.1} parent=1 // pred_check_branch
      %98 = sbr.rel (0) target = $region49
    $region48: #{tpu_custom_call.1} parent=1 // pred_region
      %99 = dma.done [#allocation6], 128
    $region49: #{tpu_custom_call.1} parent=1 // pred_fallthru
      _
    // Predicated region
    $region50: #{tpu_custom_call.1} parent=1 // pred_check
      _
    $region51: #{tpu_custom_call.1} parent=1 // pred_check_branch
      %101 = sbr.rel (0) target = $region53
    $region52: #{tpu_custom_call.1} parent=1 // pred_region
      %102 = dma.done [#allocation9], 256
    $region53: #{tpu_custom_call.1} parent=1 // pred_fallthru
      _
    // Predicated region
    $region54: #{tpu_custom_call.1} parent=1 // pred_check
      _
    $region55: #{tpu_custom_call.1} parent=1 // pred_check_branch
      %104 = sbr.rel (0) target = $region57
    $region56: #{tpu_custom_call.1} parent=1 // pred_region
      %105 = dma.done [#allocation9], 2048
    $region57: #{tpu_custom_call.1} parent=1 // pred_fallthru
      _
    // Predicated region
    $region58: #{tpu_custom_call.1} parent=1 // pred_check
      _
    $region59: #{tpu_custom_call.1} parent=1 // pred_check_branch
      %107 = sbr.rel (0) target = $region61
    $region60: #{tpu_custom_call.1} parent=1 // pred_region
      %108 = dma.done [#allocation12], 2048
    $region61: #{tpu_custom_call.1} parent=1 // pred_fallthru
      _
    %v109 = vld [vmem:[#allocation2] sm:$0xff]
    %v110 = vld [vmem:[#allocation8] sm:$0xff]
    %v111 = vld [vmem:[#allocation8 + $0x8] sm:$0xff]
    %v112 = vld [vmem:[#allocation5] sm:$0xff]
    %v113 = vld [vmem:[#allocation10] sm:$0xff]
    %v114 = vld [vmem:[#allocation10 + $0x8] sm:$0xff]
    %v115 = vld [vmem:[#allocation10 + $0x10] sm:$0xff]
    %v116 = vld [vmem:[#allocation10 + $0x18] sm:$0xff]
    %v117 = vld [vmem:[#allocation10 + $0x20] sm:$0xff]
    %v118 = vld [vmem:[#allocation10 + $0x28] sm:$0xff]
    %v119 = vld [vmem:[#allocation10 + $0x30] sm:$0xff]
    %v120 = vld [vmem:[#allocation10 + $0x38] sm:$0xff]
    %v121 = vld [vmem:[#allocation10 + $0x40] sm:$0xff]
    %v122 = vld [vmem:[#allocation10 + $0x48] sm:$0xff]
    %v123 = vld [vmem:[#allocation10 + $0x50] sm:$0xff]
    %v124 = vld [vmem:[#allocation10 + $0x58] sm:$0xff]
    %v125 = vld [vmem:[#allocation10 + $0x60] sm:$0xff]
    %v126 = vld [vmem:[#allocation10 + $0x68] sm:$0xff]
    %v127 = vld [vmem:[#allocation10 + $0x70] sm:$0xff]
    %v128 = vld [vmem:[#allocation10 + $0x78] sm:$0xff]
    %129 = vmatprep.subr.mxu0 0.0
    %130 = vmatpush1.msra.mxu0 %v128
    %131 = vmatprep.subr.mxu0 0.0
    %132 = vmatpush1.msra.mxu0 %v127
    %133 = vmatprep.subr.mxu0 0.0
    %134 = vmatpush1.msra.mxu0 %v126
    %135 = vmatprep.subr.mxu0 0.0
    %136 = vmatpush1.msra.mxu0 %v125
    %137 = vmatprep.subr.mxu0 0.0
    %138 = vmatpush1.msra.mxu0 %v124
    %139 = vmatprep.subr.mxu0 0.0
    %140 = vmatpush1.msra.mxu0 %v123
    %141 = vmatprep.subr.mxu0 0.0
    %142 = vmatpush1.msra.mxu0 %v122
    %143 = vmatprep.subr.mxu0 0.0
    %144 = vmatpush1.msra.mxu0 %v121
    %145 = vmatprep.subr.mxu0 0.0
    %146 = vmatpush1.msra.mxu0 %v120
    %147 = vmatprep.subr.mxu0 0.0
    %148 = vmatpush1.msra.mxu0 %v119
    %149 = vmatprep.subr.mxu0 0.0
    %150 = vmatpush1.msra.mxu0 %v118
    %151 = vmatprep.subr.mxu0 0.0
    %152 = vmatpush1.msra.mxu0 %v117
    %153 = vmatprep.subr.mxu0 0.0
    %154 = vmatpush1.msra.mxu0 %v116
    %155 = vmatprep.subr.mxu0 0.0
    %156 = vmatpush1.msra.mxu0 %v115
    %157 = vmatprep.subr.mxu0 0.0
    %158 = vmatpush1.msra.mxu0 %v114
    %159 = vmatprep.subr.mxu0 0.0
    %160 = vmatpush1.msra.mxu0 %v113
    %161 = vmatprep.subr.mxu0 0.0
    %162 = vmatpush2.msra.mxu0 0.0
    %163 = vmatprep.subr.mxu0 0.0
    %164 = vmatpush2.msra.mxu0 0.0
    %165 = vmatprep.subr.mxu0 0.0
    %166 = vmatpush2.msra.mxu0 0.0
    %167 = vmatprep.subr.mxu0 0.0
    %168 = vmatpush2.msra.mxu0 0.0
    %169 = vmatprep.subr.mxu0 0.0
    %170 = vmatpush2.msra.mxu0 0.0
    %171 = vmatprep.subr.mxu0 0.0
    %172 = vmatpush2.msra.mxu0 0.0
    %173 = vmatprep.subr.mxu0 0.0
    %174 = vmatpush2.msra.mxu0 0.0
    %175 = vmatprep.subr.mxu0 0.0
    %176 = vmatpush2.msra.mxu0 0.0
    %177 = vmatprep.subr.mxu0 0.0
    %178 = vmatpush2.msra.mxu0 0.0
    %179 = vmatprep.subr.mxu0 0.0
    %180 = vmatpush2.msra.mxu0 0.0
    %181 = vmatprep.subr.mxu0 0.0
    %182 = vmatpush2.msra.mxu0 0.0
    %183 = vmatprep.subr.mxu0 0.0
    %184 = vmatpush2.msra.mxu0 0.0
    %185 = vmatprep.subr.mxu0 0.0
    %186 = vmatpush2.msra.mxu0 0.0
    %187 = vmatprep.subr.mxu0 0.0
    %188 = vmatpush2.msra.mxu0 0.0
    %189 = vmatprep.subr.mxu0 0.0
    %190 = vmatpush2.msra.mxu0 0.0
    %191 = vmatprep.subr.mxu0 0.0
    %192 = vmatpush2.msra.mxu0 0.0
    %193 = vmatprep.mubr.f32.mxu0 0.0
    %194 = vmatmul.mubr.f32.gmra.mxu0 %v112
    %v195 = vpop.f32.mrf.mxu0
    %v196 = vadd.f32 0.0, %v195
    %v197 = vpop.f32.mrf.mxu0
    %198 = vdwg.mxu0
    %vm199 = vcmask 130048
    %v201 = vsel %vm199, %v109, 0
    %203 = vmatprep.subr.mxu0 0.0
    %204 = vmatpush1.msra.mxu0 0.0
    %205 = vmatprep.subr.mxu0 0.0
    %206 = vmatpush1.msra.mxu0 0.0
    %207 = vmatprep.subr.mxu0 0.0
    %208 = vmatpush1.msra.mxu0 0.0
    %209 = vmatprep.subr.mxu0 0.0
    %210 = vmatpush1.msra.mxu0 0.0
    %211 = vmatprep.subr.mxu0 0.0
    %212 = vmatpush1.msra.mxu0 0.0
    %213 = vmatprep.subr.mxu0 0.0
    %214 = vmatpush1.msra.mxu0 0.0
    %215 = vmatprep.subr.mxu0 0.0
    %216 = vmatpush1.msra.mxu0 0.0
    %217 = vmatprep.subr.mxu0 0.0
    %218 = vmatpush1.msra.mxu0 0.0
    %219 = vmatprep.subr.mxu0 0.0
    %220 = vmatpush1.msra.mxu0 0.0
    %221 = vmatprep.subr.mxu0 0.0
    %222 = vmatpush1.msra.mxu0 0.0
    %223 = vmatprep.subr.mxu0 0.0
    %224 = vmatpush1.msra.mxu0 0.0
    %225 = vmatprep.subr.mxu0 0.0
    %226 = vmatpush1.msra.mxu0 0.0
    %227 = vmatprep.subr.mxu0 0.0
    %228 = vmatpush1.msra.mxu0 0.0
    %229 = vmatprep.subr.mxu0 0.0
    %230 = vmatpush1.msra.mxu0 0.0
    %231 = vmatprep.subr.mxu0 0.0
    %232 = vmatpush1.msra.mxu0 %v111
    %233 = vmatprep.subr.mxu0 0.0
    %234 = vmatpush1.msra.mxu0 %v110
    %235 = vmatprep.subr.mxu0 0.0
    %236 = vmatpush2.msra.mxu0 0.0
    %237 = vmatprep.subr.mxu0 0.0
    %238 = vmatpush2.msra.mxu0 0.0
    %239 = vmatprep.subr.mxu0 0.0
    %240 = vmatpush2.msra.mxu0 0.0
    %241 = vmatprep.subr.mxu0 0.0
    %242 = vmatpush2.msra.mxu0 0.0
    %243 = vmatprep.subr.mxu0 0.0
    %244 = vmatpush2.msra.mxu0 0.0
    %245 = vmatprep.subr.mxu0 0.0
    %246 = vmatpush2.msra.mxu0 0.0
    %247 = vmatprep.subr.mxu0 0.0
    %248 = vmatpush2.msra.mxu0 0.0
    %249 = vmatprep.subr.mxu0 0.0
    %250 = vmatpush2.msra.mxu0 0.0
    %251 = vmatprep.subr.mxu0 0.0
    %252 = vmatpush2.msra.mxu0 0.0
    %253 = vmatprep.subr.mxu0 0.0
    %254 = vmatpush2.msra.mxu0 0.0
    %255 = vmatprep.subr.mxu0 0.0
    %256 = vmatpush2.msra.mxu0 0.0
    %257 = vmatprep.subr.mxu0 0.0
    %258 = vmatpush2.msra.mxu0 0.0
    %259 = vmatprep.subr.mxu0 0.0
    %260 = vmatpush2.msra.mxu0 0.0
    %261 = vmatprep.subr.mxu0 0.0
    %262 = vmatpush2.msra.mxu0 0.0
    %263 = vmatprep.subr.mxu0 0.0
    %264 = vmatpush2.msra.mxu0 0.0
    %265 = vmatprep.subr.mxu0 0.0
    %266 = vmatpush2.msra.mxu0 0.0
    %267 = vmatprep.mubr.f32.mxu0 0.0
    %268 = vmatmul.mubr.f32.gmra.mxu0 %v201
    %v269 = vpop.f32.mrf.mxu0
    %v270 = vadd.f32 %v196, %v269
    %v271 = vpop.f32.mrf.mxu0
    %272 = vdwg.mxu0
    %v273 = vld [vmem:[%s3] sm:$0x1]
    %v274 = vld [vmem:[#allocation7] sm:$0xff]
    %v276 = vlaneseq
    %v277 = vshrl.u32 %v276, 7
    %v278 = vsub.s32 0, %v277
    %v279 = vrot.slane %v273, %v278
    %v281 = vmul.f32 %v279, %v274
    %v282 = vld [vmem:[%s4] sm:$0x1]
    %v284 = vlaneseq
    %v285 = vshrl.u32 %v284, 7
    %v286 = vsub.s32 0, %v285
    %v287 = vrot.slane %v282, %v286
    %v289 = vmul.f32 %v287, %v270
    %v290 = vadd.f32 %v281, %v289
    %v291 = vtanh.pop %v290
    %v292 = vld [vmem:[#allocation11] sm:$0xff]
    %v293 = vld [vmem:[#allocation11 + $0x8] sm:$0xff]
    %v294 = vld [vmem:[#allocation11 + $0x10] sm:$0xff]
    %v295 = vld [vmem:[#allocation11 + $0x18] sm:$0xff]
    %v296 = vld [vmem:[#allocation11 + $0x20] sm:$0xff]
    %v297 = vld [vmem:[#allocation11 + $0x28] sm:$0xff]
    %v298 = vld [vmem:[#allocation11 + $0x30] sm:$0xff]
    %v299 = vld [vmem:[#allocation11 + $0x38] sm:$0xff]
    %v300 = vld [vmem:[#allocation11 + $0x40] sm:$0xff]
    %v301 = vld [vmem:[#allocation11 + $0x48] sm:$0xff]
    %v302 = vld [vmem:[#allocation11 + $0x50] sm:$0xff]
    %v303 = vld [vmem:[#allocation11 + $0x58] sm:$0xff]
    %v304 = vld [vmem:[#allocation11 + $0x60] sm:$0xff]
    %v305 = vld [vmem:[#allocation11 + $0x68] sm:$0xff]
    %v306 = vld [vmem:[#allocation11 + $0x70] sm:$0xff]
    %v307 = vld [vmem:[#allocation11 + $0x78] sm:$0xff]
    %v308 = vld [vmem:[%s8] sm:$0x1]
    %v310 = vlaneseq
    %v311 = vshrl.u32 %v310, 7
    %v312 = vsub.s32 0, %v311
    %v313 = vrot.slane %v308, %v312
    %315 = vmatprep.subr.mxu0 0.0
    %316 = vmatpush1.msra.mxu0 %v307
    %317 = vmatprep.subr.mxu0 0.0
    %318 = vmatpush1.msra.mxu0 %v306
    %319 = vmatprep.subr.mxu0 0.0
    %320 = vmatpush1.msra.mxu0 %v305
    %321 = vmatprep.subr.mxu0 0.0
    %322 = vmatpush1.msra.mxu0 %v304
    %323 = vmatprep.subr.mxu0 0.0
    %324 = vmatpush1.msra.mxu0 %v303
    %325 = vmatprep.subr.mxu0 0.0
    %326 = vmatpush1.msra.mxu0 %v302
    %327 = vmatprep.subr.mxu0 0.0
    %328 = vmatpush1.msra.mxu0 %v301
    %329 = vmatprep.subr.mxu0 0.0
    %330 = vmatpush1.msra.mxu0 %v300
    %331 = vmatprep.subr.mxu0 0.0
    %332 = vmatpush1.msra.mxu0 %v299
    %333 = vmatprep.subr.mxu0 0.0
    %334 = vmatpush1.msra.mxu0 %v298
    %335 = vmatprep.subr.mxu0 0.0
    %336 = vmatpush1.msra.mxu0 %v297
    %337 = vmatprep.subr.mxu0 0.0
    %338 = vmatpush1.msra.mxu0 %v296
    %339 = vmatprep.subr.mxu0 0.0
    %340 = vmatpush1.msra.mxu0 %v295
    %341 = vmatprep.subr.mxu0 0.0
    %342 = vmatpush1.msra.mxu0 %v294
    %343 = vmatprep.subr.mxu0 0.0
    %344 = vmatpush1.msra.mxu0 %v293
    %345 = vmatprep.subr.mxu0 0.0
    %346 = vmatpush1.msra.mxu0 %v292
    %347 = vmatprep.subr.mxu0 0.0
    %348 = vmatpush2.msra.mxu0 0.0
    %349 = vmatprep.subr.mxu0 0.0
    %350 = vmatpush2.msra.mxu0 0.0
    %351 = vmatprep.subr.mxu0 0.0
    %352 = vmatpush2.msra.mxu0 0.0
    %353 = vmatprep.subr.mxu0 0.0
    %354 = vmatpush2.msra.mxu0 0.0
    %355 = vmatprep.subr.mxu0 0.0
    %356 = vmatpush2.msra.mxu0 0.0
    %357 = vmatprep.subr.mxu0 0.0
    %358 = vmatpush2.msra.mxu0 0.0
    %359 = vmatprep.subr.mxu0 0.0
    %360 = vmatpush2.msra.mxu0 0.0
    %361 = vmatprep.subr.mxu0 0.0
    %362 = vmatpush2.msra.mxu0 0.0
    %363 = vmatprep.subr.mxu0 0.0
    %364 = vmatpush2.msra.mxu0 0.0
    %365 = vmatprep.subr.mxu0 0.0
    %366 = vmatpush2.msra.mxu0 0.0
    %367 = vmatprep.subr.mxu0 0.0
    %368 = vmatpush2.msra.mxu0 0.0
    %369 = vmatprep.subr.mxu0 0.0
    %370 = vmatpush2.msra.mxu0 0.0
    %371 = vmatprep.subr.mxu0 0.0
    %372 = vmatpush2.msra.mxu0 0.0
    %373 = vmatprep.subr.mxu0 0.0
    %374 = vmatpush2.msra.mxu0 0.0
    %375 = vmatprep.subr.mxu0 0.0
    %376 = vmatpush2.msra.mxu0 0.0
    %377 = vmatprep.subr.mxu0 0.0
    %378 = vmatpush2.msra.mxu0 0.0
    %379 = vmatprep.mubr.f32.mxu0 0.0
    %380 = vmatmul.mubr.f32.gmra.mxu0 %v291
    %v381 = vpop.f32.mrf.mxu0
    %v382 = vadd.f32 %v313, %v381
    %v383 = vpop.f32.mrf.mxu0
    %384 = vdwg.mxu0
    %v385 = vtanh.pop %v382
    %386 = vst [vmem:[#allocation13] sm:$0xff] %v385
    %387 = vst [vmem:[#allocation13 + $0x8] sm:$0xff] %v291
    %388 = vst [vmem:[#allocation13 + $0x10] sm:$0xff] %v290
    // Predicated region
    $region62: #{tpu_custom_call.1} parent=1 // pred_check
      _
    $region63: #{tpu_custom_call.1} parent=1 // pred_check_branch
      %390 = sbr.rel (0) target = $region65
    $region64: #{tpu_custom_call.1} parent=1 // pred_region
      %s392 = ssub.s32 384, 384
      %393 = vsyncadd [#allocation4], %s392
      %s395 = sshll.u32 [#allocation13], 4
      %s396 = int_to_ptr.vmem [resolvable:$true] %s395
      %398 = dma.vmem_to_hbm [thread:$0]  %s396, 384, %s9, [#allocation4]
    $region65: #{tpu_custom_call.1} parent=1 // pred_fallthru
      _
    // Predicated region
    $region66: #{tpu_custom_call.1} parent=1 // pred_check
      _
    $region67: #{tpu_custom_call.1} parent=1 // pred_check_branch
      %400 = sbr.rel (0) target = $region69
    $region68: #{tpu_custom_call.1} parent=1 // pred_region
      %401 = dma.done [#allocation4], 384
    $region69: #{tpu_custom_call.1} parent=1 // pred_fallthru
      _
    %402 = vsyncpa [#allocation3], 1
    %403 = vsyncpa [#allocation6], 1
    %404 = vsyncpa [#allocation9], 1
    %405 = vsyncpa [#allocation12], 1
    %406 = vsyncpa [#allocation4], 1

</llo_original>
